<compile_context>
chip_gen: v6e
topology: v6e:2x2x1
jax: 0.10.0
libtpu: 0.0.40
codegen_flags: <defaults>
</compile_context>

<pallas_src>
import functools

import jax
import jax.numpy as jnp
from jax import lax
from jax.experimental import pallas as pl
from jax.experimental.pallas import tpu as pltpu


def _round_up(n, m):
    return ((n + m - 1) // m) * m


def _relation_embedding_kernel(sbj_ref, obj_ref, params_ref, labT_ref, out_ref,
                               e_scratch, *, sbj_dim, obj_dim, out_dim, off,
                               block_rows):
    relu = lambda v: jnp.maximum(v, 0.0)

    # Static, sublane-aligned slices of the packed parameter buffer.
    w1s = params_ref[off["w1s"]:off["w1s"] + sbj_dim, :]   # (sbj_dim, out_dim)
    w1o = params_ref[off["w1o"]:off["w1o"] + obj_dim, :]   # (obj_dim, out_dim)
    b1 = params_ref[off["b1"]:off["b1"] + 1, :]            # (1, out_dim)
    w2 = params_ref[off["w2"]:off["w2"] + out_dim, :]      # (out_dim, out_dim)
    b2 = params_ref[off["b2"]:off["b2"] + 1, :]            # (1, out_dim)

    # MLP for the whole batch block (MXU work; tiny next to the scoring loop).
    # concat fused as a split matmul: relu(concat(s,o)) @ W1 == relu(s)@W1s + relu(o)@W1o.
    h = (jnp.dot(relu(sbj_ref[...]), w1s, preferred_element_type=jnp.float32)
         + jnp.dot(relu(obj_ref[...]), w1o, preferred_element_type=jnp.float32)
         + b1)
    e_scratch[...] = (jnp.dot(relu(h), w2, preferred_element_type=jnp.float32)
                      + b2)                                 # (bm, out_dim)

    bl = out_ref.shape[1]          # lane block over the (padded) label axis
    n_groups = block_rows // 8     # 8-row sublane groups

    def group_body(g, carry):
        r0 = pl.multiple_of(g * 8, 8)
        e_g = e_scratch[pl.ds(r0, 8), :]           # (8, out_dim), in vregs
        acc = jnp.zeros((8, bl), jnp.float32)      # <= 8 vregs at bl=1024
        for d in range(out_dim):                   # static unroll; pure VPU work
            lab_row = labT_ref[d:d + 1, :]         # (1, bl) Ref slice, no labT materialization
            diff = lab_row - e_g[:, d:d + 1]       # (8, bl); one lane-splat reused across bl
            r = jnp.maximum(diff, 0.0)
            acc = acc + r * r
        out_ref[pl.ds(r0, 8), :] = -jnp.sqrt(acc)  # lane-dense (8, bl) store
        return carry

    lax.fori_loop(0, n_groups, group_body, 0)


def pack_params(w1, b1, w2, b2, label_vecs, sbj_dim):
    """One-time packing of all parameters into (a) one sublane-aligned f32
    buffer and (b) a transposed, lane-padded label matrix. Done outside the
    per-call path."""
    input_len, out_dim = w1.shape
    obj_dim = input_len - sbj_dim
    num_labels = label_vecs.shape[0]

    def r8(n):
        return ((n + 7) // 8) * 8

    off = {}
    row = 0
    off["w1s"] = row; row = r8(row + sbj_dim)
    off["w1o"] = row; row = r8(row + obj_dim)
    off["b1"] = row;  row = r8(row + 1)
    off["w2"] = row;  row = r8(row + out_dim)
    off["b2"] = row;  row = r8(row + 1)
    total_rows = row

    params = jnp.zeros((total_rows, out_dim), jnp.float32)
    params = params.at[off["w1s"]:off["w1s"] + sbj_dim].set(
        w1[:sbj_dim].astype(jnp.float32))
    params = params.at[off["w1o"]:off["w1o"] + obj_dim].set(
        w1[sbj_dim:].astype(jnp.float32))
    params = params.at[off["b1"]].set(jnp.reshape(b1, (out_dim,)).astype(jnp.float32))
    params = params.at[off["w2"]:off["w2"] + out_dim].set(w2.astype(jnp.float32))
    params = params.at[off["b2"]].set(jnp.reshape(b2, (out_dim,)).astype(jnp.float32))

    lane_pad = ((num_labels + 127) // 128) * 128
    labT = jnp.zeros((out_dim, lane_pad), jnp.float32)
    labT = labT.at[:, :num_labels].set(label_vecs.astype(jnp.float32).T)
    return params, labT, off


def relation_embedding(sbj, obj, params, labT, off, *, sbj_dim, obj_dim,
                       out_dim, num_labels, block_b=256, block_l=1024,
                       trim_output=True):
    if sbj.dtype != jnp.float32:
        sbj = sbj.astype(jnp.float32)
    if obj.dtype != jnp.float32:
        obj = obj.astype(jnp.float32)

    B = sbj.shape[0]
    lane_l = labT.shape[1]                    # already a multiple of 128

    # Row-pad the batch to a multiple of 8 (sublane-group granularity).
    Bp = _round_up(B, 8)
    if Bp != B:
        pad = Bp - B
        sbj = jnp.pad(sbj, ((0, pad), (0, 0)))
        obj = jnp.pad(obj, ((0, pad), (0, 0)))

    # Batch block: as large as spill-free to amortize grid-step overhead, but
    # split into >= 2 steps when possible so both v7x TensorCores get work.
    bm = min(max(8, (block_b // 8) * 8), Bp)
    if Bp > 8 and pl.cdiv(Bp, bm) < 2:
        bm = max(8, _round_up(pl.cdiv(Bp, 2), 8))
    # Label block: lane-dense, keeps the (8, bl) accumulator register-resident
    # and all VMEM blocks tiny even on v7x (64 MiB) / v5e scoped default (16 MiB).
    bl = min(max(128, (block_l // 128) * 128), lane_l)

    grid = (pl.cdiv(Bp, bm), pl.cdiv(lane_l, bl))
    nb, nl = grid

    kernel = functools.partial(
        _relation_embedding_kernel,
        sbj_dim=sbj_dim, obj_dim=obj_dim, out_dim=out_dim, off=off,
        block_rows=bm)

    flops = (nl * 2 * Bp * (sbj_dim + obj_dim + out_dim) * out_dim  # MLP (recomputed per label block)
             + 4 * Bp * lane_l * out_dim)                           # scoring accumulation
    bytes_accessed = 4 * (nl * Bp * (sbj_dim + obj_dim)
                          + nb * nl * int(params.size)
                          + nb * int(labT.size)
                          + Bp * lane_l)
    cost = pl.CostEstimate(flops=flops, transcendentals=Bp * lane_l,
                           bytes_accessed=bytes_accessed)

    scores_padded = pl.pallas_call(
        kernel,
        out_shape=jax.ShapeDtypeStruct((Bp, lane_l), jnp.float32),
        grid=grid,
        in_specs=[
            pl.BlockSpec((bm, sbj_dim), lambda i, j: (i, 0)),
            pl.BlockSpec((bm, obj_dim), lambda i, j: (i, 0)),
            pl.BlockSpec(params.shape, lambda i, j: (0, 0)),   # resident across grid
            pl.BlockSpec((out_dim, bl), lambda i, j: (0, j)),  # label-lane tile
        ],
        out_specs=pl.BlockSpec((bm, bl), lambda i, j: (i, j)),
        scratch_shapes=[pltpu.VMEM((bm, out_dim), jnp.float32)],  # embedding block
        compiler_params=pltpu.CompilerParams(
            dimension_semantics=("parallel", "parallel")),
        cost_estimate=cost,
    )(sbj, obj, params, labT)

    if trim_output:
        return scores_padded[:B, :num_labels]
    return scores_padded   # padded (Bp, Lp) lane-dense buffer; caller masks


def relation_embedding_ref(sbj_vec, obj_vec, w1, b1, w2, b2, label_vecs):
    x = jnp.concatenate([sbj_vec, obj_vec], axis=1)
    h = jnp.maximum(x, 0.0) @ w1 + jnp.reshape(b1, (1, -1))
    e = jnp.maximum(h, 0.0) @ w2 + jnp.reshape(b2, (1, -1))
    diff = jnp.maximum(label_vecs[None, :, :] - e[:, None, :], 0.0)
    return -jnp.sqrt(jnp.sum(diff * diff, axis=-1))


if __name__ == "__main__":
    key = jax.random.PRNGKey(0)
    B = 8
    sbj_dim = 16
    obj_dim = 16
    input_len = sbj_dim + obj_dim      # 32
    output_len = 32
    num_labels = 16

    ks = jax.random.split(key, 7)
    sbj = jax.random.normal(ks[0], (B, sbj_dim), jnp.float32)
    obj = jax.random.normal(ks[1], (B, obj_dim), jnp.float32)

    # Deterministic PyTorch-Linear-style init: U(-1/sqrt(fan_in), 1/sqrt(fan_in)).
    bound1 = 1.0 / (input_len ** 0.5)
    w1 = jax.random.uniform(ks[2], (input_len, output_len), jnp.float32,
                            -bound1, bound1)
    b1 = jax.random.uniform(ks[3], (1, output_len), jnp.float32,
                            -bound1, bound1)
    bound2 = 1.0 / (output_len ** 0.5)
    w2 = jax.random.uniform(ks[4], (output_len, output_len), jnp.float32,
                            -bound2, bound2)
    b2 = jax.random.uniform(ks[5], (1, output_len), jnp.float32,
                            -bound2, bound2)

    # Synthetic replacement for the h5py 'label_vec' dataset.
    # TODO(synk): real model loads label_vec from an HDF5 file; not reproducible in-script.
    label_vecs = jax.random.normal(ks[6], (num_labels, output_len), jnp.float32)

    # One-time parameter packing (outside the per-call path).
    params, labT, off = pack_params(w1, b1, w2, b2, label_vecs, sbj_dim)

    scores = relation_embedding(sbj, obj, params, labT, off,
                                sbj_dim=sbj_dim, obj_dim=obj_dim,
                                out_dim=output_len, num_labels=num_labels)
    scores = jax.block_until_ready(scores)

    ref = relation_embedding_ref(sbj, obj, w1, b1, w2, b2, label_vecs)
    assert scores.shape == (B, num_labels)
    assert jnp.allclose(scores, ref, atol=1e-5, rtol=1e-5)

    print("KERNEL_OK")
</pallas_src>

<mosaic_0001>
module attributes {stable_mosaic.version = 11 : i64} {
  func.func @_relation_embedding_kernel(%arg0: i32, %arg1: i32, %arg2: memref<8x16xf32, #tpu.memory_space<vmem>>, %arg3: memref<8x16xf32, #tpu.memory_space<vmem>>, %arg4: memref<80x32xf32, #tpu.memory_space<vmem>>, %arg5: memref<32x128xf32, #tpu.memory_space<vmem>>, %arg6: memref<8x128xf32, #tpu.memory_space<vmem>>, %arg7: memref<8x32xf32, #tpu.memory_space<vmem>>) attributes {dimension_semantics = [#tpu.dimension_semantics<parallel>, #tpu.dimension_semantics<parallel>], iteration_bounds = array<i64: 1, 1>, scalar_prefetch = 0 : i64, scratch_operands = 1 : i64, tpu.core_type = #tpu.core_type<tc>, window_params = [{transform_indices = @transform_0, window_bounds = array<i64: 8, 16>}, {transform_indices = @transform_1, window_bounds = array<i64: 8, 16>}, {pipeline_mode = #tpu.pipeline_mode<synchronous>, transform_indices = @transform_2, window_bounds = array<i64: 80, 32>}, {transform_indices = @transform_3, window_bounds = array<i64: 32, 128>}, {transform_indices = @transform_4, window_bounds = array<i64: 8, 128>}]} {
    %c0 = arith.constant 0 : index
    %c0_0 = arith.constant 0 : index
    %0 = vector.load %arg4[%c0, %c0_0] : memref<80x32xf32, #tpu.memory_space<vmem>>, vector<16x32xf32>
    %c16 = arith.constant 16 : index
    %c0_1 = arith.constant 0 : index
    %1 = vector.load %arg4[%c16, %c0_1] : memref<80x32xf32, #tpu.memory_space<vmem>>, vector<16x32xf32>
    %c32 = arith.constant 32 : index
    %c0_2 = arith.constant 0 : index
    %2 = vector.load %arg4[%c32, %c0_2] : memref<80x32xf32, #tpu.memory_space<vmem>>, vector<1x32xf32>
    %c40 = arith.constant 40 : index
    %c0_3 = arith.constant 0 : index
    %3 = vector.load %arg4[%c40, %c0_3] : memref<80x32xf32, #tpu.memory_space<vmem>>, vector<32x32xf32>
    %c72 = arith.constant 72 : index
    %c0_4 = arith.constant 0 : index
    %4 = vector.load %arg4[%c72, %c0_4] : memref<80x32xf32, #tpu.memory_space<vmem>>, vector<1x32xf32>
    %c0_5 = arith.constant 0 : index
    %c0_6 = arith.constant 0 : index
    %5 = vector.load %arg2[%c0_5, %c0_6] : memref<8x16xf32, #tpu.memory_space<vmem>>, vector<8x16xf32>
    %cst = arith.constant 0.000000e+00 : f32
    %6 = vector.broadcast %cst : f32 to vector<8x16xf32>
    %7 = arith.maximumf %5, %6 : vector<8x16xf32>
    %cst_7 = arith.constant dense<0.000000e+00> : vector<8x32xf32>
    %8 = tpu.matmul %7, %0, %cst_7 {dimension_numbers = #tpu.dot_dimension_numbers<[1], [0], [0], [1], [0, 0, 1, 1], [], []>} : vector<8x16xf32>, vector<16x32xf32>, vector<8x32xf32> -> vector<8x32xf32>
    %c0_8 = arith.constant 0 : index
    %c0_9 = arith.constant 0 : index
    %9 = vector.load %arg3[%c0_8, %c0_9] : memref<8x16xf32, #tpu.memory_space<vmem>>, vector<8x16xf32>
    %cst_10 = arith.constant 0.000000e+00 : f32
    %10 = vector.broadcast %cst_10 : f32 to vector<8x16xf32>
    %11 = arith.maximumf %9, %10 : vector<8x16xf32>
    %cst_11 = arith.constant dense<0.000000e+00> : vector<8x32xf32>
    %12 = tpu.matmul %11, %1, %cst_11 {dimension_numbers = #tpu.dot_dimension_numbers<[1], [0], [0], [1], [0, 0, 1, 1], [], []>} : vector<8x16xf32>, vector<16x32xf32>, vector<8x32xf32> -> vector<8x32xf32>
    %13 = arith.addf %8, %12 : vector<8x32xf32>
    %14 = vector.broadcast %2 : vector<1x32xf32> to vector<8x32xf32>
    %15 = arith.addf %13, %14 : vector<8x32xf32>
    %cst_12 = arith.constant 0.000000e+00 : f32
    %16 = vector.broadcast %cst_12 : f32 to vector<8x32xf32>
    %17 = arith.maximumf %15, %16 : vector<8x32xf32>
    %cst_13 = arith.constant dense<0.000000e+00> : vector<8x32xf32>
    %18 = tpu.matmul %17, %3, %cst_13 {dimension_numbers = #tpu.dot_dimension_numbers<[1], [0], [0], [1], [0, 0, 1, 1], [], []>} : vector<8x32xf32>, vector<32x32xf32>, vector<8x32xf32> -> vector<8x32xf32>
    %19 = vector.broadcast %4 : vector<1x32xf32> to vector<8x32xf32>
    %20 = arith.addf %18, %19 : vector<8x32xf32>
    %c0_14 = arith.constant 0 : index
    %c0_15 = arith.constant 0 : index
    %21 = vector.load %arg7[%c0_14, %c0_15] : memref<8x32xf32, #tpu.memory_space<vmem>>, vector<8x32xf32>
    tpu.vector_store %arg7[%c0_14, %c0_15], %20 {strides = array<i32>} : memref<8x32xf32, #tpu.memory_space<vmem>>, vector<8x32xf32>,
    %c0_i32 = arith.constant 0 : i32
    %c8_i32 = arith.constant 8 : i32
    %22 = arith.muli %c0_i32, %c8_i32 : i32
    %23 = tpu.assume_multiple %22, 8 : i32
    %24 = arith.index_cast %23 : i32 to index
    %c0_16 = arith.constant 0 : index
    %25 = vector.load %arg7[%24, %c0_16] : memref<8x32xf32, #tpu.memory_space<vmem>>, vector<8x32xf32>
    %cst_17 = arith.constant 0.000000e+00 : f32
    %26 = vector.broadcast %cst_17 : f32 to vector<8x128xf32>
    %c0_18 = arith.constant 0 : index
    %c0_19 = arith.constant 0 : index
    %27 = vector.load %arg5[%c0_18, %c0_19] : memref<32x128xf32, #tpu.memory_space<vmem>>, vector<1x128xf32>
    %28 = vector.extract_strided_slice %25 {offsets = [0, 0], sizes = [8, 1], strides = [1, 1]} : vector<8x32xf32> to vector<8x1xf32>
    %29 = vector.broadcast %27 : vector<1x128xf32> to vector<8x128xf32>
    %30 = vector.broadcast %28 : vector<8x1xf32> to vector<8x128xf32>
    %31 = arith.subf %29, %30 : vector<8x128xf32>
    %cst_20 = arith.constant 0.000000e+00 : f32
    %32 = vector.broadcast %cst_20 : f32 to vector<8x128xf32>
    %33 = arith.maximumf %31, %32 : vector<8x128xf32>
    %34 = arith.mulf %33, %33 : vector<8x128xf32>
    %35 = arith.addf %26, %34 : vector<8x128xf32>
    %c1 = arith.constant 1 : index
    %c0_21 = arith.constant 0 : index
    %36 = vector.load %arg5[%c1, %c0_21] : memref<32x128xf32, #tpu.memory_space<vmem>>, vector<1x128xf32>
    %37 = vector.extract_strided_slice %25 {offsets = [0, 1], sizes = [8, 1], strides = [1, 1]} : vector<8x32xf32> to vector<8x1xf32>
    %38 = vector.broadcast %36 : vector<1x128xf32> to vector<8x128xf32>
    %39 = vector.broadcast %37 : vector<8x1xf32> to vector<8x128xf32>
    %40 = arith.subf %38, %39 : vector<8x128xf32>
    %cst_22 = arith.constant 0.000000e+00 : f32
    %41 = vector.broadcast %cst_22 : f32 to vector<8x128xf32>
    %42 = arith.maximumf %40, %41 : vector<8x128xf32>
    %43 = arith.mulf %42, %42 : vector<8x128xf32>
    %44 = arith.addf %35, %43 : vector<8x128xf32>
    %c2 = arith.constant 2 : index
    %c0_23 = arith.constant 0 : index
    %45 = vector.load %arg5[%c2, %c0_23] : memref<32x128xf32, #tpu.memory_space<vmem>>, vector<1x128xf32>
    %46 = vector.extract_strided_slice %25 {offsets = [0, 2], sizes = [8, 1], strides = [1, 1]} : vector<8x32xf32> to vector<8x1xf32>
    %47 = vector.broadcast %45 : vector<1x128xf32> to vector<8x128xf32>
    %48 = vector.broadcast %46 : vector<8x1xf32> to vector<8x128xf32>
    %49 = arith.subf %47, %48 : vector<8x128xf32>
    %cst_24 = arith.constant 0.000000e+00 : f32
    %50 = vector.broadcast %cst_24 : f32 to vector<8x128xf32>
    %51 = arith.maximumf %49, %50 : vector<8x128xf32>
    %52 = arith.mulf %51, %51 : vector<8x128xf32>
    %53 = arith.addf %44, %52 : vector<8x128xf32>
    %c3 = arith.constant 3 : index
    %c0_25 = arith.constant 0 : index
    %54 = vector.load %arg5[%c3, %c0_25] : memref<32x128xf32, #tpu.memory_space<vmem>>, vector<1x128xf32>
    %55 = vector.extract_strided_slice %25 {offsets = [0, 3], sizes = [8, 1], strides = [1, 1]} : vector<8x32xf32> to vector<8x1xf32>
    %56 = vector.broadcast %54 : vector<1x128xf32> to vector<8x128xf32>
    %57 = vector.broadcast %55 : vector<8x1xf32> to vector<8x128xf32>
    %58 = arith.subf %56, %57 : vector<8x128xf32>
    %cst_26 = arith.constant 0.000000e+00 : f32
    %59 = vector.broadcast %cst_26 : f32 to vector<8x128xf32>
    %60 = arith.maximumf %58, %59 : vector<8x128xf32>
    %61 = arith.mulf %60, %60 : vector<8x128xf32>
    %62 = arith.addf %53, %61 : vector<8x128xf32>
    %c4 = arith.constant 4 : index
    %c0_27 = arith.constant 0 : index
    %63 = vector.load %arg5[%c4, %c0_27] : memref<32x128xf32, #tpu.memory_space<vmem>>, vector<1x128xf32>
    %64 = vector.extract_strided_slice %25 {offsets = [0, 4], sizes = [8, 1], strides = [1, 1]} : vector<8x32xf32> to vector<8x1xf32>
    %65 = vector.broadcast %63 : vector<1x128xf32> to vector<8x128xf32>
    %66 = vector.broadcast %64 : vector<8x1xf32> to vector<8x128xf32>
    %67 = arith.subf %65, %66 : vector<8x128xf32>
    %cst_28 = arith.constant 0.000000e+00 : f32
    %68 = vector.broadcast %cst_28 : f32 to vector<8x128xf32>
    %69 = arith.maximumf %67, %68 : vector<8x128xf32>
    %70 = arith.mulf %69, %69 : vector<8x128xf32>
    %71 = arith.addf %62, %70 : vector<8x128xf32>
    %c5 = arith.constant 5 : index
    %c0_29 = arith.constant 0 : index
    %72 = vector.load %arg5[%c5, %c0_29] : memref<32x128xf32, #tpu.memory_space<vmem>>, vector<1x128xf32>
    %73 = vector.extract_strided_slice %25 {offsets = [0, 5], sizes = [8, 1], strides = [1, 1]} : vector<8x32xf32> to vector<8x1xf32>
    %74 = vector.broadcast %72 : vector<1x128xf32> to vector<8x128xf32>
    %75 = vector.broadcast %73 : vector<8x1xf32> to vector<8x128xf32>
    %76 = arith.subf %74, %75 : vector<8x128xf32>
    %cst_30 = arith.constant 0.000000e+00 : f32
    %77 = vector.broadcast %cst_30 : f32 to vector<8x128xf32>
    %78 = arith.maximumf %76, %77 : vector<8x128xf32>
    %79 = arith.mulf %78, %78 : vector<8x128xf32>
    %80 = arith.addf %71, %79 : vector<8x128xf32>
    %c6 = arith.constant 6 : index
    %c0_31 = arith.constant 0 : index
    %81 = vector.load %arg5[%c6, %c0_31] : memref<32x128xf32, #tpu.memory_space<vmem>>, vector<1x128xf32>
    %82 = vector.extract_strided_slice %25 {offsets = [0, 6], sizes = [8, 1], strides = [1, 1]} : vector<8x32xf32> to vector<8x1xf32>
    %83 = vector.broadcast %81 : vector<1x128xf32> to vector<8x128xf32>
    %84 = vector.broadcast %82 : vector<8x1xf32> to vector<8x128xf32>
    %85 = arith.subf %83, %84 : vector<8x128xf32>
    %cst_32 = arith.constant 0.000000e+00 : f32
    %86 = vector.broadcast %cst_32 : f32 to vector<8x128xf32>
    %87 = arith.maximumf %85, %86 : vector<8x128xf32>
    %88 = arith.mulf %87, %87 : vector<8x128xf32>
    %89 = arith.addf %80, %88 : vector<8x128xf32>
    %c7 = arith.constant 7 : index
    %c0_33 = arith.constant 0 : index
    %90 = vector.load %arg5[%c7, %c0_33] : memref<32x128xf32, #tpu.memory_space<vmem>>, vector<1x128xf32>
    %91 = vector.extract_strided_slice %25 {offsets = [0, 7], sizes = [8, 1], strides = [1, 1]} : vector<8x32xf32> to vector<8x1xf32>
    %92 = vector.broadcast %90 : vector<1x128xf32> to vector<8x128xf32>
    %93 = vector.broadcast %91 : vector<8x1xf32> to vector<8x128xf32>
    %94 = arith.subf %92, %93 : vector<8x128xf32>
    %cst_34 = arith.constant 0.000000e+00 : f32
    %95 = vector.broadcast %cst_34 : f32 to vector<8x128xf32>
    %96 = arith.maximumf %94, %95 : vector<8x128xf32>
    %97 = arith.mulf %96, %96 : vector<8x128xf32>
    %98 = arith.addf %89, %97 : vector<8x128xf32>
    %c8 = arith.constant 8 : index
    %c0_35 = arith.constant 0 : index
    %99 = vector.load %arg5[%c8, %c0_35] : memref<32x128xf32, #tpu.memory_space<vmem>>, vector<1x128xf32>
    %100 = vector.extract_strided_slice %25 {offsets = [0, 8], sizes = [8, 1], strides = [1, 1]} : vector<8x32xf32> to vector<8x1xf32>
    %101 = vector.broadcast %99 : vector<1x128xf32> to vector<8x128xf32>
    %102 = vector.broadcast %100 : vector<8x1xf32> to vector<8x128xf32>
    %103 = arith.subf %101, %102 : vector<8x128xf32>
    %cst_36 = arith.constant 0.000000e+00 : f32
    %104 = vector.broadcast %cst_36 : f32 to vector<8x128xf32>
    %105 = arith.maximumf %103, %104 : vector<8x128xf32>
    %106 = arith.mulf %105, %105 : vector<8x128xf32>
    %107 = arith.addf %98, %106 : vector<8x128xf32>
    %c9 = arith.constant 9 : index
    %c0_37 = arith.constant 0 : index
    %108 = vector.load %arg5[%c9, %c0_37] : memref<32x128xf32, #tpu.memory_space<vmem>>, vector<1x128xf32>
    %109 = vector.extract_strided_slice %25 {offsets = [0, 9], sizes = [8, 1], strides = [1, 1]} : vector<8x32xf32> to vector<8x1xf32>
    %110 = vector.broadcast %108 : vector<1x128xf32> to vector<8x128xf32>
    %111 = vector.broadcast %109 : vector<8x1xf32> to vector<8x128xf32>
    %112 = arith.subf %110, %111 : vector<8x128xf32>
    %cst_38 = arith.constant 0.000000e+00 : f32
    %113 = vector.broadcast %cst_38 : f32 to vector<8x128xf32>
    %114 = arith.maximumf %112, %113 : vector<8x128xf32>
    %115 = arith.mulf %114, %114 : vector<8x128xf32>
    %116 = arith.addf %107, %115 : vector<8x128xf32>
    %c10 = arith.constant 10 : index
    %c0_39 = arith.constant 0 : index
    %117 = vector.load %arg5[%c10, %c0_39] : memref<32x128xf32, #tpu.memory_space<vmem>>, vector<1x128xf32>
    %118 = vector.extract_strided_slice %25 {offsets = [0, 10], sizes = [8, 1], strides = [1, 1]} : vector<8x32xf32> to vector<8x1xf32>
    %119 = vector.broadcast %117 : vector<1x128xf32> to vector<8x128xf32>
    %120 = vector.broadcast %118 : vector<8x1xf32> to vector<8x128xf32>
    %121 = arith.subf %119, %120 : vector<8x128xf32>
    %cst_40 = arith.constant 0.000000e+00 : f32
    %122 = vector.broadcast %cst_40 : f32 to vector<8x128xf32>
    %123 = arith.maximumf %121, %122 : vector<8x128xf32>
    %124 = arith.mulf %123, %123 : vector<8x128xf32>
    %125 = arith.addf %116, %124 : vector<8x128xf32>
    %c11 = arith.constant 11 : index
    %c0_41 = arith.constant 0 : index
    %126 = vector.load %arg5[%c11, %c0_41] : memref<32x128xf32, #tpu.memory_space<vmem>>, vector<1x128xf32>
    %127 = vector.extract_strided_slice %25 {offsets = [0, 11], sizes = [8, 1], strides = [1, 1]} : vector<8x32xf32> to vector<8x1xf32>
    %128 = vector.broadcast %126 : vector<1x128xf32> to vector<8x128xf32>
    %129 = vector.broadcast %127 : vector<8x1xf32> to vector<8x128xf32>
    %130 = arith.subf %128, %129 : vector<8x128xf32>
    %cst_42 = arith.constant 0.000000e+00 : f32
    %131 = vector.broadcast %cst_42 : f32 to vector<8x128xf32>
    %132 = arith.maximumf %130, %131 : vector<8x128xf32>
    %133 = arith.mulf %132, %132 : vector<8x128xf32>
    %134 = arith.addf %125, %133 : vector<8x128xf32>
    %c12 = arith.constant 12 : index
    %c0_43 = arith.constant 0 : index
    %135 = vector.load %arg5[%c12, %c0_43] : memref<32x128xf32, #tpu.memory_space<vmem>>, vector<1x128xf32>
    %136 = vector.extract_strided_slice %25 {offsets = [0, 12], sizes = [8, 1], strides = [1, 1]} : vector<8x32xf32> to vector<8x1xf32>
    %137 = vector.broadcast %135 : vector<1x128xf32> to vector<8x128xf32>
    %138 = vector.broadcast %136 : vector<8x1xf32> to vector<8x128xf32>
    %139 = arith.subf %137, %138 : vector<8x128xf32>
    %cst_44 = arith.constant 0.000000e+00 : f32
    %140 = vector.broadcast %cst_44 : f32 to vector<8x128xf32>
    %141 = arith.maximumf %139, %140 : vector<8x128xf32>
    %142 = arith.mulf %141, %141 : vector<8x128xf32>
    %143 = arith.addf %134, %142 : vector<8x128xf32>
    %c13 = arith.constant 13 : index
    %c0_45 = arith.constant 0 : index
    %144 = vector.load %arg5[%c13, %c0_45] : memref<32x128xf32, #tpu.memory_space<vmem>>, vector<1x128xf32>
    %145 = vector.extract_strided_slice %25 {offsets = [0, 13], sizes = [8, 1], strides = [1, 1]} : vector<8x32xf32> to vector<8x1xf32>
    %146 = vector.broadcast %144 : vector<1x128xf32> to vector<8x128xf32>
    %147 = vector.broadcast %145 : vector<8x1xf32> to vector<8x128xf32>
    %148 = arith.subf %146, %147 : vector<8x128xf32>
    %cst_46 = arith.constant 0.000000e+00 : f32
    %149 = vector.broadcast %cst_46 : f32 to vector<8x128xf32>
    %150 = arith.maximumf %148, %149 : vector<8x128xf32>
    %151 = arith.mulf %150, %150 : vector<8x128xf32>
    %152 = arith.addf %143, %151 : vector<8x128xf32>
    %c14 = arith.constant 14 : index
    %c0_47 = arith.constant 0 : index
    %153 = vector.load %arg5[%c14, %c0_47] : memref<32x128xf32, #tpu.memory_space<vmem>>, vector<1x128xf32>
    %154 = vector.extract_strided_slice %25 {offsets = [0, 14], sizes = [8, 1], strides = [1, 1]} : vector<8x32xf32> to vector<8x1xf32>
    %155 = vector.broadcast %153 : vector<1x128xf32> to vector<8x128xf32>
    %156 = vector.broadcast %154 : vector<8x1xf32> to vector<8x128xf32>
    %157 = arith.subf %155, %156 : vector<8x128xf32>
    %cst_48 = arith.constant 0.000000e+00 : f32
    %158 = vector.broadcast %cst_48 : f32 to vector<8x128xf32>
    %159 = arith.maximumf %157, %158 : vector<8x128xf32>
    %160 = arith.mulf %159, %159 : vector<8x128xf32>
    %161 = arith.addf %152, %160 : vector<8x128xf32>
    %c15 = arith.constant 15 : index
    %c0_49 = arith.constant 0 : index
    %162 = vector.load %arg5[%c15, %c0_49] : memref<32x128xf32, #tpu.memory_space<vmem>>, vector<1x128xf32>
    %163 = vector.extract_strided_slice %25 {offsets = [0, 15], sizes = [8, 1], strides = [1, 1]} : vector<8x32xf32> to vector<8x1xf32>
    %164 = vector.broadcast %162 : vector<1x128xf32> to vector<8x128xf32>
    %165 = vector.broadcast %163 : vector<8x1xf32> to vector<8x128xf32>
    %166 = arith.subf %164, %165 : vector<8x128xf32>
    %cst_50 = arith.constant 0.000000e+00 : f32
    %167 = vector.broadcast %cst_50 : f32 to vector<8x128xf32>
    %168 = arith.maximumf %166, %167 : vector<8x128xf32>
    %169 = arith.mulf %168, %168 : vector<8x128xf32>
    %170 = arith.addf %161, %169 : vector<8x128xf32>
    %c16_51 = arith.constant 16 : index
    %c0_52 = arith.constant 0 : index
    %171 = vector.load %arg5[%c16_51, %c0_52] : memref<32x128xf32, #tpu.memory_space<vmem>>, vector<1x128xf32>
    %172 = vector.extract_strided_slice %25 {offsets = [0, 16], sizes = [8, 1], strides = [1, 1]} : vector<8x32xf32> to vector<8x1xf32>
    %173 = vector.broadcast %171 : vector<1x128xf32> to vector<8x128xf32>
    %174 = vector.broadcast %172 : vector<8x1xf32> to vector<8x128xf32>
    %175 = arith.subf %173, %174 : vector<8x128xf32>
    %cst_53 = arith.constant 0.000000e+00 : f32
    %176 = vector.broadcast %cst_53 : f32 to vector<8x128xf32>
    %177 = arith.maximumf %175, %176 : vector<8x128xf32>
    %178 = arith.mulf %177, %177 : vector<8x128xf32>
    %179 = arith.addf %170, %178 : vector<8x128xf32>
    %c17 = arith.constant 17 : index
    %c0_54 = arith.constant 0 : index
    %180 = vector.load %arg5[%c17, %c0_54] : memref<32x128xf32, #tpu.memory_space<vmem>>, vector<1x128xf32>
    %181 = vector.extract_strided_slice %25 {offsets = [0, 17], sizes = [8, 1], strides = [1, 1]} : vector<8x32xf32> to vector<8x1xf32>
    %182 = vector.broadcast %180 : vector<1x128xf32> to vector<8x128xf32>
    %183 = vector.broadcast %181 : vector<8x1xf32> to vector<8x128xf32>
    %184 = arith.subf %182, %183 : vector<8x128xf32>
    %cst_55 = arith.constant 0.000000e+00 : f32
    %185 = vector.broadcast %cst_55 : f32 to vector<8x128xf32>
    %186 = arith.maximumf %184, %185 : vector<8x128xf32>
    %187 = arith.mulf %186, %186 : vector<8x128xf32>
    %188 = arith.addf %179, %187 : vector<8x128xf32>
    %c18 = arith.constant 18 : index
    %c0_56 = arith.constant 0 : index
    %189 = vector.load %arg5[%c18, %c0_56] : memref<32x128xf32, #tpu.memory_space<vmem>>, vector<1x128xf32>
    %190 = vector.extract_strided_slice %25 {offsets = [0, 18], sizes = [8, 1], strides = [1, 1]} : vector<8x32xf32> to vector<8x1xf32>
    %191 = vector.broadcast %189 : vector<1x128xf32> to vector<8x128xf32>
    %192 = vector.broadcast %190 : vector<8x1xf32> to vector<8x128xf32>
    %193 = arith.subf %191, %192 : vector<8x128xf32>
    %cst_57 = arith.constant 0.000000e+00 : f32
    %194 = vector.broadcast %cst_57 : f32 to vector<8x128xf32>
    %195 = arith.maximumf %193, %194 : vector<8x128xf32>
    %196 = arith.mulf %195, %195 : vector<8x128xf32>
    %197 = arith.addf %188, %196 : vector<8x128xf32>
    %c19 = arith.constant 19 : index
    %c0_58 = arith.constant 0 : index
    %198 = vector.load %arg5[%c19, %c0_58] : memref<32x128xf32, #tpu.memory_space<vmem>>, vector<1x128xf32>
    %199 = vector.extract_strided_slice %25 {offsets = [0, 19], sizes = [8, 1], strides = [1, 1]} : vector<8x32xf32> to vector<8x1xf32>
    %200 = vector.broadcast %198 : vector<1x128xf32> to vector<8x128xf32>
    %201 = vector.broadcast %199 : vector<8x1xf32> to vector<8x128xf32>
    %202 = arith.subf %200, %201 : vector<8x128xf32>
    %cst_59 = arith.constant 0.000000e+00 : f32
    %203 = vector.broadcast %cst_59 : f32 to vector<8x128xf32>
    %204 = arith.maximumf %202, %203 : vector<8x128xf32>
    %205 = arith.mulf %204, %204 : vector<8x128xf32>
    %206 = arith.addf %197, %205 : vector<8x128xf32>
    %c20 = arith.constant 20 : index
    %c0_60 = arith.constant 0 : index
    %207 = vector.load %arg5[%c20, %c0_60] : memref<32x128xf32, #tpu.memory_space<vmem>>, vector<1x128xf32>
    %208 = vector.extract_strided_slice %25 {offsets = [0, 20], sizes = [8, 1], strides = [1, 1]} : vector<8x32xf32> to vector<8x1xf32>
    %209 = vector.broadcast %207 : vector<1x128xf32> to vector<8x128xf32>
    %210 = vector.broadcast %208 : vector<8x1xf32> to vector<8x128xf32>
    %211 = arith.subf %209, %210 : vector<8x128xf32>
    %cst_61 = arith.constant 0.000000e+00 : f32
    %212 = vector.broadcast %cst_61 : f32 to vector<8x128xf32>
    %213 = arith.maximumf %211, %212 : vector<8x128xf32>
    %214 = arith.mulf %213, %213 : vector<8x128xf32>
    %215 = arith.addf %206, %214 : vector<8x128xf32>
    %c21 = arith.constant 21 : index
    %c0_62 = arith.constant 0 : index
    %216 = vector.load %arg5[%c21, %c0_62] : memref<32x128xf32, #tpu.memory_space<vmem>>, vector<1x128xf32>
    %217 = vector.extract_strided_slice %25 {offsets = [0, 21], sizes = [8, 1], strides = [1, 1]} : vector<8x32xf32> to vector<8x1xf32>
    %218 = vector.broadcast %216 : vector<1x128xf32> to vector<8x128xf32>
    %219 = vector.broadcast %217 : vector<8x1xf32> to vector<8x128xf32>
    %220 = arith.subf %218, %219 : vector<8x128xf32>
    %cst_63 = arith.constant 0.000000e+00 : f32
    %221 = vector.broadcast %cst_63 : f32 to vector<8x128xf32>
    %222 = arith.maximumf %220, %221 : vector<8x128xf32>
    %223 = arith.mulf %222, %222 : vector<8x128xf32>
    %224 = arith.addf %215, %223 : vector<8x128xf32>
    %c22 = arith.constant 22 : index
    %c0_64 = arith.constant 0 : index
    %225 = vector.load %arg5[%c22, %c0_64] : memref<32x128xf32, #tpu.memory_space<vmem>>, vector<1x128xf32>
    %226 = vector.extract_strided_slice %25 {offsets = [0, 22], sizes = [8, 1], strides = [1, 1]} : vector<8x32xf32> to vector<8x1xf32>
    %227 = vector.broadcast %225 : vector<1x128xf32> to vector<8x128xf32>
    %228 = vector.broadcast %226 : vector<8x1xf32> to vector<8x128xf32>
    %229 = arith.subf %227, %228 : vector<8x128xf32>
    %cst_65 = arith.constant 0.000000e+00 : f32
    %230 = vector.broadcast %cst_65 : f32 to vector<8x128xf32>
    %231 = arith.maximumf %229, %230 : vector<8x128xf32>
    %232 = arith.mulf %231, %231 : vector<8x128xf32>
    %233 = arith.addf %224, %232 : vector<8x128xf32>
    %c23 = arith.constant 23 : index
    %c0_66 = arith.constant 0 : index
    %234 = vector.load %arg5[%c23, %c0_66] : memref<32x128xf32, #tpu.memory_space<vmem>>, vector<1x128xf32>
    %235 = vector.extract_strided_slice %25 {offsets = [0, 23], sizes = [8, 1], strides = [1, 1]} : vector<8x32xf32> to vector<8x1xf32>
    %236 = vector.broadcast %234 : vector<1x128xf32> to vector<8x128xf32>
    %237 = vector.broadcast %235 : vector<8x1xf32> to vector<8x128xf32>
    %238 = arith.subf %236, %237 : vector<8x128xf32>
    %cst_67 = arith.constant 0.000000e+00 : f32
    %239 = vector.broadcast %cst_67 : f32 to vector<8x128xf32>
    %240 = arith.maximumf %238, %239 : vector<8x128xf32>
    %241 = arith.mulf %240, %240 : vector<8x128xf32>
    %242 = arith.addf %233, %241 : vector<8x128xf32>
    %c24 = arith.constant 24 : index
    %c0_68 = arith.constant 0 : index
    %243 = vector.load %arg5[%c24, %c0_68] : memref<32x128xf32, #tpu.memory_space<vmem>>, vector<1x128xf32>
    %244 = vector.extract_strided_slice %25 {offsets = [0, 24], sizes = [8, 1], strides = [1, 1]} : vector<8x32xf32> to vector<8x1xf32>
    %245 = vector.broadcast %243 : vector<1x128xf32> to vector<8x128xf32>
    %246 = vector.broadcast %244 : vector<8x1xf32> to vector<8x128xf32>
    %247 = arith.subf %245, %246 : vector<8x128xf32>
    %cst_69 = arith.constant 0.000000e+00 : f32
    %248 = vector.broadcast %cst_69 : f32 to vector<8x128xf32>
    %249 = arith.maximumf %247, %248 : vector<8x128xf32>
    %250 = arith.mulf %249, %249 : vector<8x128xf32>
    %251 = arith.addf %242, %250 : vector<8x128xf32>
    %c25 = arith.constant 25 : index
    %c0_70 = arith.constant 0 : index
    %252 = vector.load %arg5[%c25, %c0_70] : memref<32x128xf32, #tpu.memory_space<vmem>>, vector<1x128xf32>
    %253 = vector.extract_strided_slice %25 {offsets = [0, 25], sizes = [8, 1], strides = [1, 1]} : vector<8x32xf32> to vector<8x1xf32>
    %254 = vector.broadcast %252 : vector<1x128xf32> to vector<8x128xf32>
    %255 = vector.broadcast %253 : vector<8x1xf32> to vector<8x128xf32>
    %256 = arith.subf %254, %255 : vector<8x128xf32>
    %cst_71 = arith.constant 0.000000e+00 : f32
    %257 = vector.broadcast %cst_71 : f32 to vector<8x128xf32>
    %258 = arith.maximumf %256, %257 : vector<8x128xf32>
    %259 = arith.mulf %258, %258 : vector<8x128xf32>
    %260 = arith.addf %251, %259 : vector<8x128xf32>
    %c26 = arith.constant 26 : index
    %c0_72 = arith.constant 0 : index
    %261 = vector.load %arg5[%c26, %c0_72] : memref<32x128xf32, #tpu.memory_space<vmem>>, vector<1x128xf32>
    %262 = vector.extract_strided_slice %25 {offsets = [0, 26], sizes = [8, 1], strides = [1, 1]} : vector<8x32xf32> to vector<8x1xf32>
    %263 = vector.broadcast %261 : vector<1x128xf32> to vector<8x128xf32>
    %264 = vector.broadcast %262 : vector<8x1xf32> to vector<8x128xf32>
    %265 = arith.subf %263, %264 : vector<8x128xf32>
    %cst_73 = arith.constant 0.000000e+00 : f32
    %266 = vector.broadcast %cst_73 : f32 to vector<8x128xf32>
    %267 = arith.maximumf %265, %266 : vector<8x128xf32>
    %268 = arith.mulf %267, %267 : vector<8x128xf32>
    %269 = arith.addf %260, %268 : vector<8x128xf32>
    %c27 = arith.constant 27 : index
    %c0_74 = arith.constant 0 : index
    %270 = vector.load %arg5[%c27, %c0_74] : memref<32x128xf32, #tpu.memory_space<vmem>>, vector<1x128xf32>
    %271 = vector.extract_strided_slice %25 {offsets = [0, 27], sizes = [8, 1], strides = [1, 1]} : vector<8x32xf32> to vector<8x1xf32>
    %272 = vector.broadcast %270 : vector<1x128xf32> to vector<8x128xf32>
    %273 = vector.broadcast %271 : vector<8x1xf32> to vector<8x128xf32>
    %274 = arith.subf %272, %273 : vector<8x128xf32>
    %cst_75 = arith.constant 0.000000e+00 : f32
    %275 = vector.broadcast %cst_75 : f32 to vector<8x128xf32>
    %276 = arith.maximumf %274, %275 : vector<8x128xf32>
    %277 = arith.mulf %276, %276 : vector<8x128xf32>
    %278 = arith.addf %269, %277 : vector<8x128xf32>
    %c28 = arith.constant 28 : index
    %c0_76 = arith.constant 0 : index
    %279 = vector.load %arg5[%c28, %c0_76] : memref<32x128xf32, #tpu.memory_space<vmem>>, vector<1x128xf32>
    %280 = vector.extract_strided_slice %25 {offsets = [0, 28], sizes = [8, 1], strides = [1, 1]} : vector<8x32xf32> to vector<8x1xf32>
    %281 = vector.broadcast %279 : vector<1x128xf32> to vector<8x128xf32>
    %282 = vector.broadcast %280 : vector<8x1xf32> to vector<8x128xf32>
    %283 = arith.subf %281, %282 : vector<8x128xf32>
    %cst_77 = arith.constant 0.000000e+00 : f32
    %284 = vector.broadcast %cst_77 : f32 to vector<8x128xf32>
    %285 = arith.maximumf %283, %284 : vector<8x128xf32>
    %286 = arith.mulf %285, %285 : vector<8x128xf32>
    %287 = arith.addf %278, %286 : vector<8x128xf32>
    %c29 = arith.constant 29 : index
    %c0_78 = arith.constant 0 : index
    %288 = vector.load %arg5[%c29, %c0_78] : memref<32x128xf32, #tpu.memory_space<vmem>>, vector<1x128xf32>
    %289 = vector.extract_strided_slice %25 {offsets = [0, 29], sizes = [8, 1], strides = [1, 1]} : vector<8x32xf32> to vector<8x1xf32>
    %290 = vector.broadcast %288 : vector<1x128xf32> to vector<8x128xf32>
    %291 = vector.broadcast %289 : vector<8x1xf32> to vector<8x128xf32>
    %292 = arith.subf %290, %291 : vector<8x128xf32>
    %cst_79 = arith.constant 0.000000e+00 : f32
    %293 = vector.broadcast %cst_79 : f32 to vector<8x128xf32>
    %294 = arith.maximumf %292, %293 : vector<8x128xf32>
    %295 = arith.mulf %294, %294 : vector<8x128xf32>
    %296 = arith.addf %287, %295 : vector<8x128xf32>
    %c30 = arith.constant 30 : index
    %c0_80 = arith.constant 0 : index
    %297 = vector.load %arg5[%c30, %c0_80] : memref<32x128xf32, #tpu.memory_space<vmem>>, vector<1x128xf32>
    %298 = vector.extract_strided_slice %25 {offsets = [0, 30], sizes = [8, 1], strides = [1, 1]} : vector<8x32xf32> to vector<8x1xf32>
    %299 = vector.broadcast %297 : vector<1x128xf32> to vector<8x128xf32>
    %300 = vector.broadcast %298 : vector<8x1xf32> to vector<8x128xf32>
    %301 = arith.subf %299, %300 : vector<8x128xf32>
    %cst_81 = arith.constant 0.000000e+00 : f32
    %302 = vector.broadcast %cst_81 : f32 to vector<8x128xf32>
    %303 = arith.maximumf %301, %302 : vector<8x128xf32>
    %304 = arith.mulf %303, %303 : vector<8x128xf32>
    %305 = arith.addf %296, %304 : vector<8x128xf32>
    %c31 = arith.constant 31 : index
    %c0_82 = arith.constant 0 : index
    %306 = vector.load %arg5[%c31, %c0_82] : memref<32x128xf32, #tpu.memory_space<vmem>>, vector<1x128xf32>
    %307 = vector.extract_strided_slice %25 {offsets = [0, 31], sizes = [8, 1], strides = [1, 1]} : vector<8x32xf32> to vector<8x1xf32>
    %308 = vector.broadcast %306 : vector<1x128xf32> to vector<8x128xf32>
    %309 = vector.broadcast %307 : vector<8x1xf32> to vector<8x128xf32>
    %310 = arith.subf %308, %309 : vector<8x128xf32>
    %cst_83 = arith.constant 0.000000e+00 : f32
    %311 = vector.broadcast %cst_83 : f32 to vector<8x128xf32>
    %312 = arith.maximumf %310, %311 : vector<8x128xf32>
    %313 = arith.mulf %312, %312 : vector<8x128xf32>
    %314 = arith.addf %305, %313 : vector<8x128xf32>
    %315 = math.sqrt %314 : vector<8x128xf32>
    %cst_84 = arith.constant 0.000000e+00 : f32
    %316 = vector.broadcast %cst_84 : f32 to vector<8x128xf32>
    %317 = arith.subf %316, %315 : vector<8x128xf32>
    %318 = arith.index_cast %23 : i32 to index
    %c0_85 = arith.constant 0 : index
    %319 = vector.load %arg6[%318, %c0_85] : memref<8x128xf32, #tpu.memory_space<vmem>>, vector<8x128xf32>
    tpu.vector_store %arg6[%318, %c0_85], %317 {strides = array<i32>} : memref<8x128xf32, #tpu.memory_space<vmem>>, vector<8x128xf32>,
    %c1_i32 = arith.constant 1 : i32
    return
  }
  func.func @transform_0(%arg0: i32, %arg1: i32) -> (i32, i32) {
    %c0_i32 = arith.constant 0 : i32
    %c0_i32_0 = arith.constant 0 : i32
    return %arg0, %c0_i32 : i32, i32
  }
  func.func @transform_1(%arg0: i32, %arg1: i32) -> (i32, i32) {
    %c0_i32 = arith.constant 0 : i32
    %c0_i32_0 = arith.constant 0 : i32
    return %arg0, %c0_i32 : i32, i32
  }
  func.func @transform_2(%arg0: i32, %arg1: i32) -> (i32, i32) {
    %c0_i32 = arith.constant 0 : i32
    %c0_i32_0 = arith.constant 0 : i32
    %c0_i32_1 = arith.constant 0 : i32
    return %c0_i32, %c0_i32_0 : i32, i32
  }
  func.func @transform_3(%arg0: i32, %arg1: i32) -> (i32, i32) {
    %c0_i32 = arith.constant 0 : i32
    %c0_i32_0 = arith.constant 0 : i32
    return %c0_i32, %arg1 : i32, i32
  }
  func.func @transform_4(%arg0: i32, %arg1: i32) -> (i32, i32) {
    %c0_i32 = arith.constant 0 : i32
    return %arg0, %arg1 : i32, i32
  }
}

</mosaic_0001>

<llo_original>
// kernel: tpu_custom_call.1
$region0: #{tpu_custom_call.1}
  #allocation0 [shape = 'u32[]', space=smem, size = 0x4, offset = 0x4, fixed_abs, tag = 'smem constant byte address 0x4 - core index']
  #allocation1 [shape = 'u32[144,128]{1,0:T(1,128)}', space=vmem, size = 0x12000, scoped, tag = 'internal scratch']
  #allocation2 [shape = 'f32[8,32]{1,0:T(8,128)}', space=vmem, size = 0x1000, scoped, tag = 'scratch operand']
  %s0 = inlined_call_operand.vmem [shape: f32[8,16], index: 0, kind: input, shape index: {}]
  %s1 = inlined_call_operand.vmem [shape: f32[8,16], index: 1, kind: input, shape index: {}]
  %s2 = inlined_call_operand.vmem [shape: f32[80,32], index: 2, kind: input, shape index: {}]
  %s3 = inlined_call_operand.vmem [shape: f32[32,128], index: 3, kind: input, shape index: {}]
  %s4 = inlined_call_operand.hbm [shape: f32[8,128], index: 4, kind: output, shape index: {}]
  %s5 = sld [smem:[#allocation0]]
  $region26: #{tpu_custom_call.1} parent=0
    _
  %s7 = ssub.s32 1, %s5
  %s8 = scalar_select 0, %s7, %s5
  $region1: #{tpu_custom_call.1} parent=0
    #allocation3 [shape = 'u8[4096]{0}', space=vmem, size = 0x1000, scoped, tag = 'output window, operand 0, single buffered']
    #allocation4 [shape = 's32[1]{0}', space=sflag, size = 0x4, scoped, tag = 'scoped memory for tpu_custom_call.1']
    %9 = vsyncpa [#allocation4], 0
    // Predicated region
    $region2: #{tpu_custom_call.1} parent=1 // pred_check
      _
    $region3: #{tpu_custom_call.1} parent=1 // pred_check_branch
      %11 = sbr.rel (0) target = $region5
    $region4: #{tpu_custom_call.1} parent=1 // pred_region
      _
    $region5: #{tpu_custom_call.1} parent=1 // pred_fallthru
      _
    // Predicated region
    $region6: #{tpu_custom_call.1} parent=1 // pred_check
      _
    $region7: #{tpu_custom_call.1} parent=1 // pred_check_branch
      %13 = sbr.rel (0) target = $region9
    $region8: #{tpu_custom_call.1} parent=1 // pred_region
      _
    $region9: #{tpu_custom_call.1} parent=1 // pred_fallthru
      _
    // Predicated region
    $region10: #{tpu_custom_call.1} parent=1 // pred_check
      _
    $region11: #{tpu_custom_call.1} parent=1 // pred_check_branch
      %15 = sbr.rel (0) target = $region13
    $region12: #{tpu_custom_call.1} parent=1 // pred_region
      _
    $region13: #{tpu_custom_call.1} parent=1 // pred_fallthru
      _
    // Predicated region
    $region14: #{tpu_custom_call.1} parent=1 // pred_check
      _
    $region15: #{tpu_custom_call.1} parent=1 // pred_check_branch
      %17 = sbr.rel (0) target = $region17
    $region16: #{tpu_custom_call.1} parent=1 // pred_region
      _
    $region17: #{tpu_custom_call.1} parent=1 // pred_fallthru
      _
    %v18 = vld [vmem:[%s2] sm:$0xff]
    %v19 = vld [vmem:[%s2 + $0x8] sm:$0xff]
    %v20 = vld [vmem:[%s2 + $0x10] sm:$0xff]
    %v21 = vld [vmem:[%s2 + $0x18] sm:$0xff]
    %v22 = vld [vmem:[%s2 + $0x20] sm:$0x1]
    %v23 = vld [vmem:[%s2 + $0x28] sm:$0xff]
    %v24 = vld [vmem:[%s2 + $0x30] sm:$0xff]
    %v25 = vld [vmem:[%s2 + $0x38] sm:$0xff]
    %v26 = vld [vmem:[%s2 + $0x40] sm:$0xff]
    %v27 = vld [vmem:[%s2 + $0x48] sm:$0x1]
    %v28 = vld [vmem:[%s0] sm:$0xff]
    %v29 = vmax.f32 %v28, 0.0
    %v30 = vld [vmem:[%s1] sm:$0xff]
    %v31 = vmax.f32 %v30, 0.0
    %vm32 = vcmask 130048
    %v34 = vsel %vm32, %v31, 0
    %36 = vmatprep.subr.mxu0 0.0
    %37 = vmatpush1.msra.mxu0 0.0
    %38 = vmatprep.subr.mxu0 0.0
    %39 = vmatpush1.msra.mxu0 0.0
    %40 = vmatprep.subr.mxu0 0.0
    %41 = vmatpush1.msra.mxu0 0.0
    %42 = vmatprep.subr.mxu0 0.0
    %43 = vmatpush1.msra.mxu0 0.0
    %44 = vmatprep.subr.mxu0 0.0
    %45 = vmatpush1.msra.mxu0 0.0
    %46 = vmatprep.subr.mxu0 0.0
    %47 = vmatpush1.msra.mxu0 0.0
    %48 = vmatprep.subr.mxu0 0.0
    %49 = vmatpush1.msra.mxu0 0.0
    %50 = vmatprep.subr.mxu0 0.0
    %51 = vmatpush1.msra.mxu0 0.0
    %52 = vmatprep.subr.mxu0 0.0
    %53 = vmatpush1.msra.mxu0 0.0
    %54 = vmatprep.subr.mxu0 0.0
    %55 = vmatpush1.msra.mxu0 0.0
    %56 = vmatprep.subr.mxu0 0.0
    %57 = vmatpush1.msra.mxu0 0.0
    %58 = vmatprep.subr.mxu0 0.0
    %59 = vmatpush1.msra.mxu0 0.0
    %60 = vmatprep.subr.mxu0 0.0
    %61 = vmatpush1.msra.mxu0 0.0
    %62 = vmatprep.subr.mxu0 0.0
    %63 = vmatpush1.msra.mxu0 0.0
    %64 = vmatprep.subr.mxu0 0.0
    %65 = vmatpush1.msra.mxu0 %v21
    %66 = vmatprep.subr.mxu0 0.0
    %67 = vmatpush1.msra.mxu0 %v20
    %68 = vmatprep.subr.mxu0 0.0
    %69 = vmatpush2.msra.mxu0 0.0
    %70 = vmatprep.subr.mxu0 0.0
    %71 = vmatpush2.msra.mxu0 0.0
    %72 = vmatprep.subr.mxu0 0.0
    %73 = vmatpush2.msra.mxu0 0.0
    %74 = vmatprep.subr.mxu0 0.0
    %75 = vmatpush2.msra.mxu0 0.0
    %76 = vmatprep.subr.mxu0 0.0
    %77 = vmatpush2.msra.mxu0 0.0
    %78 = vmatprep.subr.mxu0 0.0
    %79 = vmatpush2.msra.mxu0 0.0
    %80 = vmatprep.subr.mxu0 0.0
    %81 = vmatpush2.msra.mxu0 0.0
    %82 = vmatprep.subr.mxu0 0.0
    %83 = vmatpush2.msra.mxu0 0.0
    %84 = vmatprep.subr.mxu0 0.0
    %85 = vmatpush2.msra.mxu0 0.0
    %86 = vmatprep.subr.mxu0 0.0
    %87 = vmatpush2.msra.mxu0 0.0
    %88 = vmatprep.subr.mxu0 0.0
    %89 = vmatpush2.msra.mxu0 0.0
    %90 = vmatprep.subr.mxu0 0.0
    %91 = vmatpush2.msra.mxu0 0.0
    %92 = vmatprep.subr.mxu0 0.0
    %93 = vmatpush2.msra.mxu0 0.0
    %94 = vmatprep.subr.mxu0 0.0
    %95 = vmatpush2.msra.mxu0 0.0
    %96 = vmatprep.subr.mxu0 0.0
    %97 = vmatpush2.msra.mxu0 0.0
    %98 = vmatprep.subr.mxu0 0.0
    %99 = vmatpush2.msra.mxu0 0.0
    %100 = vmatprep.mubr.f32.mxu0 0.0
    %101 = vmatmul.mubr.f32.gmra.mxu0 %v34
    %v102 = vpop.f32.mrf.mxu0
    %v103 = vadd.f32 0.0, %v102
    %v104 = vpop.f32.mrf.mxu0
    %105 = vdwg.mxu0
    %v107 = vsel %vm32, %v29, 0
    %109 = vmatprep.subr.mxu0 0.0
    %110 = vmatpush1.msra.mxu0 0.0
    %111 = vmatprep.subr.mxu0 0.0
    %112 = vmatpush1.msra.mxu0 0.0
    %113 = vmatprep.subr.mxu0 0.0
    %114 = vmatpush1.msra.mxu0 0.0
    %115 = vmatprep.subr.mxu0 0.0
    %116 = vmatpush1.msra.mxu0 0.0
    %117 = vmatprep.subr.mxu0 0.0
    %118 = vmatpush1.msra.mxu0 0.0
    %119 = vmatprep.subr.mxu0 0.0
    %120 = vmatpush1.msra.mxu0 0.0
    %121 = vmatprep.subr.mxu0 0.0
    %122 = vmatpush1.msra.mxu0 0.0
    %123 = vmatprep.subr.mxu0 0.0
    %124 = vmatpush1.msra.mxu0 0.0
    %125 = vmatprep.subr.mxu0 0.0
    %126 = vmatpush1.msra.mxu0 0.0
    %127 = vmatprep.subr.mxu0 0.0
    %128 = vmatpush1.msra.mxu0 0.0
    %129 = vmatprep.subr.mxu0 0.0
    %130 = vmatpush1.msra.mxu0 0.0
    %131 = vmatprep.subr.mxu0 0.0
    %132 = vmatpush1.msra.mxu0 0.0
    %133 = vmatprep.subr.mxu0 0.0
    %134 = vmatpush1.msra.mxu0 0.0
    %135 = vmatprep.subr.mxu0 0.0
    %136 = vmatpush1.msra.mxu0 0.0
    %137 = vmatprep.subr.mxu0 0.0
    %138 = vmatpush1.msra.mxu0 %v19
    %139 = vmatprep.subr.mxu0 0.0
    %140 = vmatpush1.msra.mxu0 %v18
    %141 = vmatprep.subr.mxu0 0.0
    %142 = vmatpush2.msra.mxu0 0.0
    %143 = vmatprep.subr.mxu0 0.0
    %144 = vmatpush2.msra.mxu0 0.0
    %145 = vmatprep.subr.mxu0 0.0
    %146 = vmatpush2.msra.mxu0 0.0
    %147 = vmatprep.subr.mxu0 0.0
    %148 = vmatpush2.msra.mxu0 0.0
    %149 = vmatprep.subr.mxu0 0.0
    %150 = vmatpush2.msra.mxu0 0.0
    %151 = vmatprep.subr.mxu0 0.0
    %152 = vmatpush2.msra.mxu0 0.0
    %153 = vmatprep.subr.mxu0 0.0
    %154 = vmatpush2.msra.mxu0 0.0
    %155 = vmatprep.subr.mxu0 0.0
    %156 = vmatpush2.msra.mxu0 0.0
    %157 = vmatprep.subr.mxu0 0.0
    %158 = vmatpush2.msra.mxu0 0.0
    %159 = vmatprep.subr.mxu0 0.0
    %160 = vmatpush2.msra.mxu0 0.0
    %161 = vmatprep.subr.mxu0 0.0
    %162 = vmatpush2.msra.mxu0 0.0
    %163 = vmatprep.subr.mxu0 0.0
    %164 = vmatpush2.msra.mxu0 0.0
    %165 = vmatprep.subr.mxu0 0.0
    %166 = vmatpush2.msra.mxu0 0.0
    %167 = vmatprep.subr.mxu0 0.0
    %168 = vmatpush2.msra.mxu0 0.0
    %169 = vmatprep.subr.mxu0 0.0
    %170 = vmatpush2.msra.mxu0 0.0
    %171 = vmatprep.subr.mxu0 0.0
    %172 = vmatpush2.msra.mxu0 0.0
    %173 = vmatprep.mubr.f32.mxu0 0.0
    %174 = vmatmul.mubr.f32.gmra.mxu0 %v107
    %v175 = vpop.f32.mrf.mxu0
    %v176 = vadd.f32 %v103, %v175
    %v177 = vpop.f32.mrf.mxu0
    %178 = vdwg.mxu0
    %v179 = vlaneseq
    %v180 = vshrl.u32 %v179, 7
    %v181 = vsub.s32 0, %v180
    %v182 = vrot.slane %v22, %v181
    %v183 = vadd.f32 %v176, %v182
    %v184 = vmax.f32 %v183, 0.0
    %v185 = vlaneseq
    %v186 = vshrl.u32 %v185, 7
    %v187 = vsub.s32 0, %v186
    %v188 = vrot.slane %v27, %v187
    %vm189 = vcmask 261120
    %v191 = vsel %vm189, %v184, 0
    %193 = vmatprep.subr.mxu0 0.0
    %194 = vmatpush1.msra.mxu0 0.0
    %195 = vmatprep.subr.mxu0 0.0
    %196 = vmatpush1.msra.mxu0 0.0
    %197 = vmatprep.subr.mxu0 0.0
    %198 = vmatpush1.msra.mxu0 0.0
    %199 = vmatprep.subr.mxu0 0.0
    %200 = vmatpush1.msra.mxu0 0.0
    %201 = vmatprep.subr.mxu0 0.0
    %202 = vmatpush1.msra.mxu0 0.0
    %203 = vmatprep.subr.mxu0 0.0
    %204 = vmatpush1.msra.mxu0 0.0
    %205 = vmatprep.subr.mxu0 0.0
    %206 = vmatpush1.msra.mxu0 0.0
    %207 = vmatprep.subr.mxu0 0.0
    %208 = vmatpush1.msra.mxu0 0.0
    %209 = vmatprep.subr.mxu0 0.0
    %210 = vmatpush1.msra.mxu0 0.0
    %211 = vmatprep.subr.mxu0 0.0
    %212 = vmatpush1.msra.mxu0 0.0
    %213 = vmatprep.subr.mxu0 0.0
    %214 = vmatpush1.msra.mxu0 0.0
    %215 = vmatprep.subr.mxu0 0.0
    %216 = vmatpush1.msra.mxu0 0.0
    %217 = vmatprep.subr.mxu0 0.0
    %218 = vmatpush1.msra.mxu0 %v26
    %219 = vmatprep.subr.mxu0 0.0
    %220 = vmatpush1.msra.mxu0 %v25
    %221 = vmatprep.subr.mxu0 0.0
    %222 = vmatpush1.msra.mxu0 %v24
    %223 = vmatprep.subr.mxu0 0.0
    %224 = vmatpush1.msra.mxu0 %v23
    %225 = vmatprep.subr.mxu0 0.0
    %226 = vmatpush2.msra.mxu0 0.0
    %227 = vmatprep.subr.mxu0 0.0
    %228 = vmatpush2.msra.mxu0 0.0
    %229 = vmatprep.subr.mxu0 0.0
    %230 = vmatpush2.msra.mxu0 0.0
    %231 = vmatprep.subr.mxu0 0.0
    %232 = vmatpush2.msra.mxu0 0.0
    %233 = vmatprep.subr.mxu0 0.0
    %234 = vmatpush2.msra.mxu0 0.0
    %235 = vmatprep.subr.mxu0 0.0
    %236 = vmatpush2.msra.mxu0 0.0
    %237 = vmatprep.subr.mxu0 0.0
    %238 = vmatpush2.msra.mxu0 0.0
    %239 = vmatprep.subr.mxu0 0.0
    %240 = vmatpush2.msra.mxu0 0.0
    %241 = vmatprep.subr.mxu0 0.0
    %242 = vmatpush2.msra.mxu0 0.0
    %243 = vmatprep.subr.mxu0 0.0
    %244 = vmatpush2.msra.mxu0 0.0
    %245 = vmatprep.subr.mxu0 0.0
    %246 = vmatpush2.msra.mxu0 0.0
    %247 = vmatprep.subr.mxu0 0.0
    %248 = vmatpush2.msra.mxu0 0.0
    %249 = vmatprep.subr.mxu0 0.0
    %250 = vmatpush2.msra.mxu0 0.0
    %251 = vmatprep.subr.mxu0 0.0
    %252 = vmatpush2.msra.mxu0 0.0
    %253 = vmatprep.subr.mxu0 0.0
    %254 = vmatpush2.msra.mxu0 0.0
    %255 = vmatprep.subr.mxu0 0.0
    %256 = vmatpush2.msra.mxu0 0.0
    %257 = vmatprep.mubr.f32.mxu0 0.0
    %258 = vmatmul.mubr.f32.gmra.mxu0 %v191
    %v259 = vpop.f32.mrf.mxu0
    %v260 = vadd.f32 %v188, %v259
    %v261 = vpop.f32.mrf.mxu0
    %262 = vdwg.mxu0
    %263 = vst.msk [vmem:[#allocation2] sm:$0xff] %vm189, %v260
    %v264 = vld [vmem:[#allocation2] sm:$0xff]
    %v265 = vld [vmem:[%s3] sm:$0x1]
    %v266 = vlaneseq
    %v267 = vshrl.u32 %v266, 7
    %v268 = vsub.s32 0, %v267
    %v269 = vrot.slane %v265, %v268
    %271 = vset.pattern.permute.xlu0 0
    %272 = vperm.xlu0 %271, %v264
    %v273 = vpop.permute.xlu0 %272
    %v275 = vsub.f32 %v269, %v273
    %v276 = vmax.f32 %v275, 0.0
    %v277 = vmul.f32 %v276, %v276
    %v278 = vadd.f32 %v277, 0.0
    %v279 = vld [vmem:[%s3 + $0x1] sm:$0x1]
    %v280 = vlaneseq
    %v281 = vshrl.u32 %v280, 7
    %v282 = vsub.s32 0, %v281
    %v283 = vrot.slane %v279, %v282
    %284 = vset.pattern.permute.xlu0 1
    %285 = vperm.xlu0 %284, %v264
    %v286 = vpop.permute.xlu0 %285
    %v288 = vsub.f32 %v283, %v286
    %v289 = vmax.f32 %v288, 0.0
    %v290 = vmul.f32 %v289, %v289
    %v291 = vadd.f32 %v278, %v290
    %v292 = vld [vmem:[%s3 + $0x2] sm:$0x1]
    %v293 = vlaneseq
    %v294 = vshrl.u32 %v293, 7
    %v295 = vsub.s32 0, %v294
    %v296 = vrot.slane %v292, %v295
    %297 = vset.pattern.permute.xlu0 2
    %298 = vperm.xlu0 %297, %v264
    %v299 = vpop.permute.xlu0 %298
    %v301 = vsub.f32 %v296, %v299
    %v302 = vmax.f32 %v301, 0.0
    %v303 = vmul.f32 %v302, %v302
    %v304 = vadd.f32 %v291, %v303
    %v305 = vld [vmem:[%s3 + $0x3] sm:$0x1]
    %v306 = vlaneseq
    %v307 = vshrl.u32 %v306, 7
    %v308 = vsub.s32 0, %v307
    %v309 = vrot.slane %v305, %v308
    %310 = vset.pattern.permute.xlu0 3
    %311 = vperm.xlu0 %310, %v264
    %v312 = vpop.permute.xlu0 %311
    %v314 = vsub.f32 %v309, %v312
    %v315 = vmax.f32 %v314, 0.0
    %v316 = vmul.f32 %v315, %v315
    %v317 = vadd.f32 %v304, %v316
    %v318 = vld [vmem:[%s3 + $0x4] sm:$0x1]
    %v319 = vlaneseq
    %v320 = vshrl.u32 %v319, 7
    %v321 = vsub.s32 0, %v320
    %v322 = vrot.slane %v318, %v321
    %323 = vset.pattern.permute.xlu0 4
    %324 = vperm.xlu0 %323, %v264
    %v325 = vpop.permute.xlu0 %324
    %v327 = vsub.f32 %v322, %v325
    %v328 = vmax.f32 %v327, 0.0
    %v329 = vmul.f32 %v328, %v328
    %v330 = vadd.f32 %v317, %v329
    %v331 = vld [vmem:[%s3 + $0x5] sm:$0x1]
    %v332 = vlaneseq
    %v333 = vshrl.u32 %v332, 7
    %v334 = vsub.s32 0, %v333
    %v335 = vrot.slane %v331, %v334
    %336 = vset.pattern.permute.xlu0 5
    %337 = vperm.xlu0 %336, %v264
    %v338 = vpop.permute.xlu0 %337
    %v340 = vsub.f32 %v335, %v338
    %v341 = vmax.f32 %v340, 0.0
    %v342 = vmul.f32 %v341, %v341
    %v343 = vadd.f32 %v330, %v342
    %v344 = vld [vmem:[%s3 + $0x6] sm:$0x1]
    %v345 = vlaneseq
    %v346 = vshrl.u32 %v345, 7
    %v347 = vsub.s32 0, %v346
    %v348 = vrot.slane %v344, %v347
    %349 = vset.pattern.permute.xlu0 6
    %350 = vperm.xlu0 %349, %v264
    %v351 = vpop.permute.xlu0 %350
    %v353 = vsub.f32 %v348, %v351
    %v354 = vmax.f32 %v353, 0.0
    %v355 = vmul.f32 %v354, %v354
    %v356 = vadd.f32 %v343, %v355
    %v357 = vld [vmem:[%s3 + $0x7] sm:$0x1]
    %v358 = vlaneseq
    %v359 = vshrl.u32 %v358, 7
    %v360 = vsub.s32 0, %v359
    %v361 = vrot.slane %v357, %v360
    %362 = vset.pattern.permute.xlu0 7
    %363 = vperm.xlu0 %362, %v264
    %v364 = vpop.permute.xlu0 %363
    %v366 = vsub.f32 %v361, %v364
    %v367 = vmax.f32 %v366, 0.0
    %v368 = vmul.f32 %v367, %v367
    %v369 = vadd.f32 %v356, %v368
    %v370 = vld [vmem:[%s3 + $0x8] sm:$0x1]
    %v371 = vlaneseq
    %v372 = vshrl.u32 %v371, 7
    %v373 = vsub.s32 0, %v372
    %v374 = vrot.slane %v370, %v373
    %375 = vset.pattern.permute.xlu0 8
    %376 = vperm.xlu0 %375, %v264
    %v377 = vpop.permute.xlu0 %376
    %v379 = vsub.f32 %v374, %v377
    %v380 = vmax.f32 %v379, 0.0
    %v381 = vmul.f32 %v380, %v380
    %v382 = vadd.f32 %v369, %v381
    %v383 = vld [vmem:[%s3 + $0x9] sm:$0x1]
    %v384 = vlaneseq
    %v385 = vshrl.u32 %v384, 7
    %v386 = vsub.s32 0, %v385
    %v387 = vrot.slane %v383, %v386
    %388 = vset.pattern.permute.xlu0 9
    %389 = vperm.xlu0 %388, %v264
    %v390 = vpop.permute.xlu0 %389
    %v392 = vsub.f32 %v387, %v390
    %v393 = vmax.f32 %v392, 0.0
    %v394 = vmul.f32 %v393, %v393
    %v395 = vadd.f32 %v382, %v394
    %v396 = vld [vmem:[%s3 + $0xa] sm:$0x1]
    %v397 = vlaneseq
    %v398 = vshrl.u32 %v397, 7
    %v399 = vsub.s32 0, %v398
    %v400 = vrot.slane %v396, %v399
    %401 = vset.pattern.permute.xlu0 10
    %402 = vperm.xlu0 %401, %v264
    %v403 = vpop.permute.xlu0 %402
    %v405 = vsub.f32 %v400, %v403
    %v406 = vmax.f32 %v405, 0.0
    %v407 = vmul.f32 %v406, %v406
    %v408 = vadd.f32 %v395, %v407
    %v409 = vld [vmem:[%s3 + $0xb] sm:$0x1]
    %v410 = vlaneseq
    %v411 = vshrl.u32 %v410, 7
    %v412 = vsub.s32 0, %v411
    %v413 = vrot.slane %v409, %v412
    %414 = vset.pattern.permute.xlu0 11
    %415 = vperm.xlu0 %414, %v264
    %v416 = vpop.permute.xlu0 %415
    %v418 = vsub.f32 %v413, %v416
    %v419 = vmax.f32 %v418, 0.0
    %v420 = vmul.f32 %v419, %v419
    %v421 = vadd.f32 %v408, %v420
    %v422 = vld [vmem:[%s3 + $0xc] sm:$0x1]
    %v423 = vlaneseq
    %v424 = vshrl.u32 %v423, 7
    %v425 = vsub.s32 0, %v424
    %v426 = vrot.slane %v422, %v425
    %427 = vset.pattern.permute.xlu0 12
    %428 = vperm.xlu0 %427, %v264
    %v429 = vpop.permute.xlu0 %428
    %v431 = vsub.f32 %v426, %v429
    %v432 = vmax.f32 %v431, 0.0
    %v433 = vmul.f32 %v432, %v432
    %v434 = vadd.f32 %v421, %v433
    %v435 = vld [vmem:[%s3 + $0xd] sm:$0x1]
    %v436 = vlaneseq
    %v437 = vshrl.u32 %v436, 7
    %v438 = vsub.s32 0, %v437
    %v439 = vrot.slane %v435, %v438
    %440 = vset.pattern.permute.xlu0 13
    %441 = vperm.xlu0 %440, %v264
    %v442 = vpop.permute.xlu0 %441
    %v444 = vsub.f32 %v439, %v442
    %v445 = vmax.f32 %v444, 0.0
    %v446 = vmul.f32 %v445, %v445
    %v447 = vadd.f32 %v434, %v446
    %v448 = vld [vmem:[%s3 + $0xe] sm:$0x1]
    %v449 = vlaneseq
    %v450 = vshrl.u32 %v449, 7
    %v451 = vsub.s32 0, %v450
    %v452 = vrot.slane %v448, %v451
    %453 = vset.pattern.permute.xlu0 14
    %454 = vperm.xlu0 %453, %v264
    %v455 = vpop.permute.xlu0 %454
    %v457 = vsub.f32 %v452, %v455
    %v458 = vmax.f32 %v457, 0.0
    %v459 = vmul.f32 %v458, %v458
    %v460 = vadd.f32 %v447, %v459
    %v461 = vld [vmem:[%s3 + $0xf] sm:$0x1]
    %v462 = vlaneseq
    %v463 = vshrl.u32 %v462, 7
    %v464 = vsub.s32 0, %v463
    %v465 = vrot.slane %v461, %v464
    %466 = vset.pattern.permute.xlu0 15
    %467 = vperm.xlu0 %466, %v264
    %v468 = vpop.permute.xlu0 %467
    %v470 = vsub.f32 %v465, %v468
    %v471 = vmax.f32 %v470, 0.0
    %v472 = vmul.f32 %v471, %v471
    %v473 = vadd.f32 %v460, %v472
    %v474 = vld [vmem:[%s3 + $0x10] sm:$0x1]
    %v475 = vlaneseq
    %v476 = vshrl.u32 %v475, 7
    %v477 = vsub.s32 0, %v476
    %v478 = vrot.slane %v474, %v477
    %479 = vset.pattern.permute.xlu0 16
    %480 = vperm.xlu0 %479, %v264
    %v481 = vpop.permute.xlu0 %480
    %v483 = vsub.f32 %v478, %v481
    %v484 = vmax.f32 %v483, 0.0
    %v485 = vmul.f32 %v484, %v484
    %v486 = vadd.f32 %v473, %v485
    %v487 = vld [vmem:[%s3 + $0x11] sm:$0x1]
    %v488 = vlaneseq
    %v489 = vshrl.u32 %v488, 7
    %v490 = vsub.s32 0, %v489
    %v491 = vrot.slane %v487, %v490
    %492 = vset.pattern.permute.xlu0 17
    %493 = vperm.xlu0 %492, %v264
    %v494 = vpop.permute.xlu0 %493
    %v496 = vsub.f32 %v491, %v494
    %v497 = vmax.f32 %v496, 0.0
    %v498 = vmul.f32 %v497, %v497
    %v499 = vadd.f32 %v486, %v498
    %v500 = vld [vmem:[%s3 + $0x12] sm:$0x1]
    %v501 = vlaneseq
    %v502 = vshrl.u32 %v501, 7
    %v503 = vsub.s32 0, %v502
    %v504 = vrot.slane %v500, %v503
    %505 = vset.pattern.permute.xlu0 18
    %506 = vperm.xlu0 %505, %v264
    %v507 = vpop.permute.xlu0 %506
    %v509 = vsub.f32 %v504, %v507
    %v510 = vmax.f32 %v509, 0.0
    %v511 = vmul.f32 %v510, %v510
    %v512 = vadd.f32 %v499, %v511
    %v513 = vld [vmem:[%s3 + $0x13] sm:$0x1]
    %v514 = vlaneseq
    %v515 = vshrl.u32 %v514, 7
    %v516 = vsub.s32 0, %v515
    %v517 = vrot.slane %v513, %v516
    %518 = vset.pattern.permute.xlu0 19
    %519 = vperm.xlu0 %518, %v264
    %v520 = vpop.permute.xlu0 %519
    %v522 = vsub.f32 %v517, %v520
    %v523 = vmax.f32 %v522, 0.0
    %v524 = vmul.f32 %v523, %v523
    %v525 = vadd.f32 %v512, %v524
    %v526 = vld [vmem:[%s3 + $0x14] sm:$0x1]
    %v527 = vlaneseq
    %v528 = vshrl.u32 %v527, 7
    %v529 = vsub.s32 0, %v528
    %v530 = vrot.slane %v526, %v529
    %531 = vset.pattern.permute.xlu0 20
    %532 = vperm.xlu0 %531, %v264
    %v533 = vpop.permute.xlu0 %532
    %v535 = vsub.f32 %v530, %v533
    %v536 = vmax.f32 %v535, 0.0
    %v537 = vmul.f32 %v536, %v536
    %v538 = vadd.f32 %v525, %v537
    %v539 = vld [vmem:[%s3 + $0x15] sm:$0x1]
    %v540 = vlaneseq
    %v541 = vshrl.u32 %v540, 7
    %v542 = vsub.s32 0, %v541
    %v543 = vrot.slane %v539, %v542
    %544 = vset.pattern.permute.xlu0 21
    %545 = vperm.xlu0 %544, %v264
    %v546 = vpop.permute.xlu0 %545
    %v548 = vsub.f32 %v543, %v546
    %v549 = vmax.f32 %v548, 0.0
    %v550 = vmul.f32 %v549, %v549
    %v551 = vadd.f32 %v538, %v550
    %v552 = vld [vmem:[%s3 + $0x16] sm:$0x1]
    %v553 = vlaneseq
    %v554 = vshrl.u32 %v553, 7
    %v555 = vsub.s32 0, %v554
    %v556 = vrot.slane %v552, %v555
    %557 = vset.pattern.permute.xlu0 22
    %558 = vperm.xlu0 %557, %v264
    %v559 = vpop.permute.xlu0 %558
    %v561 = vsub.f32 %v556, %v559
    %v562 = vmax.f32 %v561, 0.0
    %v563 = vmul.f32 %v562, %v562
    %v564 = vadd.f32 %v551, %v563
    %v565 = vld [vmem:[%s3 + $0x17] sm:$0x1]
    %v566 = vlaneseq
    %v567 = vshrl.u32 %v566, 7
    %v568 = vsub.s32 0, %v567
    %v569 = vrot.slane %v565, %v568
    %570 = vset.pattern.permute.xlu0 23
    %571 = vperm.xlu0 %570, %v264
    %v572 = vpop.permute.xlu0 %571
    %v574 = vsub.f32 %v569, %v572
    %v575 = vmax.f32 %v574, 0.0
    %v576 = vmul.f32 %v575, %v575
    %v577 = vadd.f32 %v564, %v576
    %v578 = vld [vmem:[%s3 + $0x18] sm:$0x1]
    %v579 = vlaneseq
    %v580 = vshrl.u32 %v579, 7
    %v581 = vsub.s32 0, %v580
    %v582 = vrot.slane %v578, %v581
    %583 = vset.pattern.permute.xlu0 24
    %584 = vperm.xlu0 %583, %v264
    %v585 = vpop.permute.xlu0 %584
    %v587 = vsub.f32 %v582, %v585
    %v588 = vmax.f32 %v587, 0.0
    %v589 = vmul.f32 %v588, %v588
    %v590 = vadd.f32 %v577, %v589
    %v591 = vld [vmem:[%s3 + $0x19] sm:$0x1]
    %v592 = vlaneseq
    %v593 = vshrl.u32 %v592, 7
    %v594 = vsub.s32 0, %v593
    %v595 = vrot.slane %v591, %v594
    %596 = vset.pattern.permute.xlu0 25
    %597 = vperm.xlu0 %596, %v264
    %v598 = vpop.permute.xlu0 %597
    %v600 = vsub.f32 %v595, %v598
    %v601 = vmax.f32 %v600, 0.0
    %v602 = vmul.f32 %v601, %v601
    %v603 = vadd.f32 %v590, %v602
    %v604 = vld [vmem:[%s3 + $0x1a] sm:$0x1]
    %v605 = vlaneseq
    %v606 = vshrl.u32 %v605, 7
    %v607 = vsub.s32 0, %v606
    %v608 = vrot.slane %v604, %v607
    %609 = vset.pattern.permute.xlu0 26
    %610 = vperm.xlu0 %609, %v264
    %v611 = vpop.permute.xlu0 %610
    %v613 = vsub.f32 %v608, %v611
    %v614 = vmax.f32 %v613, 0.0
    %v615 = vmul.f32 %v614, %v614
    %v616 = vadd.f32 %v603, %v615
    %v617 = vld [vmem:[%s3 + $0x1b] sm:$0x1]
    %v618 = vlaneseq
    %v619 = vshrl.u32 %v618, 7
    %v620 = vsub.s32 0, %v619
    %v621 = vrot.slane %v617, %v620
    %622 = vset.pattern.permute.xlu0 27
    %623 = vperm.xlu0 %622, %v264
    %v624 = vpop.permute.xlu0 %623
    %v626 = vsub.f32 %v621, %v624
    %v627 = vmax.f32 %v626, 0.0
    %v628 = vmul.f32 %v627, %v627
    %v629 = vadd.f32 %v616, %v628
    %v630 = vld [vmem:[%s3 + $0x1c] sm:$0x1]
    %v631 = vlaneseq
    %v632 = vshrl.u32 %v631, 7
    %v633 = vsub.s32 0, %v632
    %v634 = vrot.slane %v630, %v633
    %635 = vset.pattern.permute.xlu0 28
    %636 = vperm.xlu0 %635, %v264
    %v637 = vpop.permute.xlu0 %636
    %v639 = vsub.f32 %v634, %v637
    %v640 = vmax.f32 %v639, 0.0
    %v641 = vmul.f32 %v640, %v640
    %v642 = vadd.f32 %v629, %v641
    %v643 = vld [vmem:[%s3 + $0x1d] sm:$0x1]
    %v644 = vlaneseq
    %v645 = vshrl.u32 %v644, 7
    %v646 = vsub.s32 0, %v645
    %v647 = vrot.slane %v643, %v646
    %648 = vset.pattern.permute.xlu0 29
    %649 = vperm.xlu0 %648, %v264
    %v650 = vpop.permute.xlu0 %649
    %v652 = vsub.f32 %v647, %v650
    %v653 = vmax.f32 %v652, 0.0
    %v654 = vmul.f32 %v653, %v653
    %v655 = vadd.f32 %v642, %v654
    %v656 = vld [vmem:[%s3 + $0x1e] sm:$0x1]
    %v657 = vlaneseq
    %v658 = vshrl.u32 %v657, 7
    %v659 = vsub.s32 0, %v658
    %v660 = vrot.slane %v656, %v659
    %661 = vset.pattern.permute.xlu0 30
    %662 = vperm.xlu0 %661, %v264
    %v663 = vpop.permute.xlu0 %662
    %v665 = vsub.f32 %v660, %v663
    %v666 = vmax.f32 %v665, 0.0
    %v667 = vmul.f32 %v666, %v666
    %v668 = vadd.f32 %v655, %v667
    %v669 = vld [vmem:[%s3 + $0x1f] sm:$0x1]
    %v670 = vlaneseq
    %v671 = vshrl.u32 %v670, 7
    %v672 = vsub.s32 0, %v671
    %v673 = vrot.slane %v669, %v672
    %674 = vset.pattern.permute.xlu0 31
    %675 = vperm.xlu0 %674, %v264
    %v676 = vpop.permute.xlu0 %675
    %v678 = vsub.f32 %v673, %v676
    %v679 = vmax.f32 %v678, 0.0
    %v680 = vmul.f32 %v679, %v679
    %v681 = vadd.f32 %v668, %v680
    %v682 = vrsqrt.pop %v681
    %v683 = vmul.f32 %v681, %v682
    %vm684 = vcmp.eq.f32.partialorder %v681, inf
    %v685 = vsel %vm684, %v681, %v683
    %vm686 = vcmp.eq.f32.partialorder %v681, 0.0
    %v687 = vand.u32 %v681, 2147483648
    %v688 = vsel %vm686, %v687, %v685
    %v689 = vsub.f32 0.0, %v688
    %690 = vst [vmem:[#allocation3] sm:$0xff] %v689
    // Predicated region
    $region18: #{tpu_custom_call.1} parent=1 // pred_check
      _
    $region19: #{tpu_custom_call.1} parent=1 // pred_check_branch
      %692 = sbr.rel (0) target = $region21
    $region20: #{tpu_custom_call.1} parent=1 // pred_region
      %s694 = ssub.s32 128, 128
      %695 = vsyncadd [#allocation4], %s694
      %s697 = sshll.u32 [#allocation3], 4
      %s698 = int_to_ptr.vmem [resolvable:$true] %s697
      %700 = dma.vmem_to_hbm [thread:$0]  %s698, 128, %s4, [#allocation4]
    $region21: #{tpu_custom_call.1} parent=1 // pred_fallthru
      _
    // Predicated region
    $region22: #{tpu_custom_call.1} parent=1 // pred_check
      _
    $region23: #{tpu_custom_call.1} parent=1 // pred_check_branch
      %702 = sbr.rel (0) target = $region25
    $region24: #{tpu_custom_call.1} parent=1 // pred_region
      %703 = dma.done [#allocation4], 128
    $region25: #{tpu_custom_call.1} parent=1 // pred_fallthru
      _
    %704 = vsyncpa [#allocation4], 1

</llo_original>
